<compile_context>
chip_gen: v6e
topology: v6e:2x2x1
jax: 0.10.0
libtpu: 0.0.40
codegen_flags: <defaults>
</compile_context>

<pallas_src>
import jax
import jax.numpy as jnp
from jax.experimental import pallas as pl
from jax.experimental.pallas import tpu as pltpu

HIDDEN = 32


def critic_kernel(xt_ref, w1_ref, b1_ref, w2_ref, b2_ref, out_ref):
    # xt_ref : (n_state, TB)   x transposed, batch on lanes (bf16 or f32)
    # w1_ref : (HIDDEN, n_state)  fc1.weight in PyTorch layout (bf16 or f32)
    # b1_ref : (HIDDEN, 1) f32    w2_ref : (1, HIDDEN) f32
    # b2_ref : (1, 1) f32 in SMEM
    # out_ref: (1, TB) f32        lane-dense output block
    # Layer 1 on the MXU with f32 accumulation; bias + ReLU on the VPU in f32.
    h = jnp.dot(w1_ref[...], xt_ref[...], preferred_element_type=jnp.float32)
    h = jnp.maximum(h + b1_ref[...], 0.0)
    # Layer 2: (1, HIDDEN) @ (HIDDEN, TB) -> (1, TB); result stays lane-dense.
    out = jnp.dot(w2_ref[...], h, preferred_element_type=jnp.float32)
    out_ref[...] = (out + b2_ref[0, 0]).astype(out_ref.dtype)


def _round_up(x, m):
    return ((x + m - 1) // m) * m


def _vmem_capacity_bytes():
    """Per-core VMEM capacity; conservative (v7x) fallback if unqueryable."""
    try:
        info = pltpu.get_tpu_info()
        cap = getattr(info, "vmem_capacity_bytes", None)
        if cap:
            return int(cap)
    except Exception:
        pass
    return 64 * 1024 * 1024


def critic_forward(x, w1, b1, w2, b2, *, tb_max=32768, use_bf16=True):
    """Critic forward pass.

    x : (B, n_state) f32
    w1: (HIDDEN, n_state) f32   (nn.Linear(n_state, HIDDEN).weight)
    b1: (HIDDEN,) f32           (fc1.bias)
    w2: (1, HIDDEN) f32         (nn.Linear(HIDDEN, 1).weight)
    b2: (1,) f32                (fc2.bias)
    returns (B, 1) f32
    """
    B, n_state = x.shape
    hidden = w1.shape[0]
    assert w1.shape == (hidden, n_state), w1.shape

    b1c = jnp.asarray(b1, jnp.float32).reshape(hidden, 1)
    w2r = jnp.asarray(w2, jnp.float32).reshape(1, hidden)
    b2s = jnp.asarray(b2, jnp.float32).reshape(1, 1)

    # --- generation-aware tile sizing ------------------------------------
    x_bytes = 2 if use_bf16 else 4
    cap = _vmem_capacity_bytes()
    budget = min(int(cap * 0.7), 80 * 1024 * 1024)       # ~44.8 MiB on v7x
    # per batch row: double-buffered x tile + double-buffered f32 out tile
    per_row = 2 * (n_state * x_bytes + 4)
    tb_budget = max(128, (budget // per_row) // 128 * 128)

    b_aligned = _round_up(B, 128)
    tb = min(tb_budget, int(tb_max), b_aligned)
    # Keep >= 2 grid steps (>= 4 for big batches): lets the "parallel" batch
    # axis split across v7x's two TensorCores and gives the pipeline overlap.
    min_steps = 1
    if b_aligned >= 2 * 128:
        min_steps = 2
    if b_aligned >= 4 * 2048:
        min_steps = 4
    tb = max(128, min(tb, _round_up(-(-b_aligned // min_steps), 128)))

    b_pad = _round_up(B, tb)
    grid = (b_pad // tb,)

    # --- feature-major (transposed) input layout --------------------------
    xt = x.T                                   # (n_state, B): batch on lanes
    if b_pad != B:
        xt = jnp.pad(xt, ((0, 0), (0, b_pad - B)))
    if use_bf16:
        xt = xt.astype(jnp.bfloat16)
        w1k = jnp.asarray(w1, jnp.bfloat16)
    else:
        xt = xt.astype(jnp.float32)
        w1k = jnp.asarray(w1, jnp.float32)

    needed = 2 * tb * n_state * x_bytes + 2 * tb * 4 + (2 << 20)
    vmem_limit = int(min(max(32 * 1024 * 1024, needed), cap - (8 << 20)))

    out = pl.pallas_call(
        critic_kernel,
        out_shape=jax.ShapeDtypeStruct((1, b_pad), jnp.float32),
        grid=grid,
        in_specs=[
            pl.BlockSpec((n_state, tb), lambda i: (0, i)),        # x.T tiled on batch
            pl.BlockSpec((hidden, n_state), lambda i: (0, 0)),    # w1: VMEM-resident
            pl.BlockSpec((hidden, 1), lambda i: (0, 0)),          # b1
            pl.BlockSpec((1, hidden), lambda i: (0, 0)),          # w2
            pl.BlockSpec(memory_space=pltpu.MemorySpace.SMEM),    # b2 scalar in SMEM
        ],
        out_specs=pl.BlockSpec((1, tb), lambda i: (0, i)),        # lane-dense output
        compiler_params=pltpu.CompilerParams(
            dimension_semantics=("parallel",),
            vmem_limit_bytes=vmem_limit,
        ),
    )(xt, w1k, b1c, w2r, b2s)

    return out[0, :B].reshape(B, 1)


def reference_forward(x, w1, b1, w2, b2):
    # PyTorch semantics: relu(x @ W1.T + b1) @ W2.T + b2, in f32.
    h = jnp.maximum(
        jnp.dot(x, w1.T, precision=jax.lax.Precision.HIGHEST) + b1.reshape(1, -1), 0.0)
    return (jnp.dot(h, w2.reshape(1, -1).T, precision=jax.lax.Precision.HIGHEST)
            + b2.reshape(1, 1))


def reference_forward_bf16_inputs(x, w1, b1, w2, b2):
    # Same math, but with x / w1 rounded through bf16 (matches the kernel's
    # default bf16 MXU-operand path; accumulation stays f32).
    return reference_forward(
        x.astype(jnp.bfloat16).astype(jnp.float32),
        w1.astype(jnp.bfloat16).astype(jnp.float32), b1, w2, b2)


if __name__ == "__main__":
    # Small shapes consistent with the module: n_state from the env's
    # observation space (CartPole-like), batch of a few states.
    batch = 2
    n_state = 8

    key = jax.random.PRNGKey(0)
    k_x, k_w1, k_b1, k_w2, k_b2 = jax.random.split(key, 5)

    x = jax.random.normal(k_x, (batch, n_state), dtype=jnp.float32)

    # Deterministic synthetic parameter init (uniform, roughly matching
    # PyTorch's default Linear init scale 1/sqrt(fan_in)), in PyTorch layouts.
    bound1 = 1.0 / jnp.sqrt(n_state)
    w1 = jax.random.uniform(k_w1, (HIDDEN, n_state), jnp.float32, -bound1, bound1)
    b1 = jax.random.uniform(k_b1, (HIDDEN,), jnp.float32, -bound1, bound1)

    bound2 = 1.0 / jnp.sqrt(HIDDEN)
    w2 = jax.random.uniform(k_w2, (1, HIDDEN), jnp.float32, -bound2, bound2)
    b2 = jax.random.uniform(k_b2, (1,), jnp.float32, -bound2, bound2)

    # Default (bf16 x / w1) path vs bf16-rounded reference.
    out = jax.block_until_ready(critic_forward(x, w1, b1, w2, b2))
    ref = reference_forward_bf16_inputs(x, w1, b1, w2, b2)
    assert out.shape == (batch, 1), out.shape
    assert jnp.allclose(out, ref, atol=2e-3, rtol=2e-3), (out, ref)

    # Pure f32 path vs exact f32 reference.
    out_f32 = jax.block_until_ready(critic_forward(x, w1, b1, w2, b2, use_bf16=False))
    ref_f32 = reference_forward(x, w1, b1, w2, b2)
    assert jnp.allclose(out_f32, ref_f32, atol=2e-3, rtol=2e-3), (out_f32, ref_f32)

    # Exercise the multi-step-grid / padded path at a larger, non-divisible batch.
    big_B = 2500
    xb = jax.random.normal(jax.random.PRNGKey(1), (big_B, n_state), jnp.float32)
    out_b = jax.block_until_ready(critic_forward(xb, w1, b1, w2, b2))
    ref_b = reference_forward_bf16_inputs(xb, w1, b1, w2, b2)
    assert out_b.shape == (big_B, 1), out_b.shape
    assert jnp.allclose(out_b, ref_b, atol=2e-3, rtol=2e-3)

    print("KERNEL_OK")
</pallas_src>

<mosaic_0001>
module attributes {stable_mosaic.version = 11 : i64} {
  func.func @critic_kernel(%arg0: i32, %arg1: memref<8x128xbf16, #tpu.memory_space<vmem>>, %arg2: memref<32x8xbf16, #tpu.memory_space<vmem>>, %arg3: memref<32x1xf32, #tpu.memory_space<vmem>>, %arg4: memref<1x32xf32, #tpu.memory_space<vmem>>, %arg5: memref<1x1xf32, #tpu.memory_space<smem>>, %arg6: memref<1x128xf32, #tpu.memory_space<vmem>>) attributes {dimension_semantics = [#tpu.dimension_semantics<parallel>], iteration_bounds = array<i64: 1>, scalar_prefetch = 0 : i64, scratch_operands = 0 : i64, tpu.core_type = #tpu.core_type<tc>, window_params = [{transform_indices = @transform_0, window_bounds = array<i64: 8, 128>}, {pipeline_mode = #tpu.pipeline_mode<synchronous>, transform_indices = @transform_1, window_bounds = array<i64: 32, 8>}, {pipeline_mode = #tpu.pipeline_mode<synchronous>, transform_indices = @transform_2, window_bounds = array<i64: 32, 1>}, {pipeline_mode = #tpu.pipeline_mode<synchronous>, transform_indices = @transform_3, window_bounds = array<i64: 1, 32>}, {transform_indices = @transform_4, window_bounds = array<i64: 1, 1>}, {transform_indices = @transform_5, window_bounds = array<i64: 1, 128>}]} {
    %c0 = arith.constant 0 : index
    %c0_0 = arith.constant 0 : index
    %0 = vector.load %arg2[%c0, %c0_0] : memref<32x8xbf16, #tpu.memory_space<vmem>>, vector<32x8xbf16>
    %c0_1 = arith.constant 0 : index
    %c0_2 = arith.constant 0 : index
    %1 = vector.load %arg1[%c0_1, %c0_2] : memref<8x128xbf16, #tpu.memory_space<vmem>>, vector<8x128xbf16>
    %cst = arith.constant dense<0.000000e+00> : vector<32x128xf32>
    %2 = tpu.matmul %0, %1, %cst {dimension_numbers = #tpu.dot_dimension_numbers<[1], [0], [0], [1], [0, 0, 1, 1], [], []>} : vector<32x8xbf16>, vector<8x128xbf16>, vector<32x128xf32> -> vector<32x128xf32>
    %c0_3 = arith.constant 0 : index
    %c0_4 = arith.constant 0 : index
    %3 = vector.load %arg3[%c0_3, %c0_4] : memref<32x1xf32, #tpu.memory_space<vmem>>, vector<32x1xf32>
    %4 = vector.broadcast %3 : vector<32x1xf32> to vector<32x128xf32>
    %5 = arith.addf %2, %4 : vector<32x128xf32>
    %cst_5 = arith.constant 0.000000e+00 : f32
    %6 = vector.broadcast %cst_5 : f32 to vector<32x128xf32>
    %7 = arith.maximumf %5, %6 : vector<32x128xf32>
    %c0_6 = arith.constant 0 : index
    %c0_7 = arith.constant 0 : index
    %8 = vector.load %arg4[%c0_6, %c0_7] : memref<1x32xf32, #tpu.memory_space<vmem>>, vector<1x32xf32>
    %cst_8 = arith.constant dense<0.000000e+00> : vector<1x128xf32>
    %9 = tpu.matmul %8, %7, %cst_8 {dimension_numbers = #tpu.dot_dimension_numbers<[1], [0], [0], [1], [0, 0, 1, 1], [], []>} : vector<1x32xf32>, vector<32x128xf32>, vector<1x128xf32> -> vector<1x128xf32>
    %c0_9 = arith.constant 0 : index
    %c0_10 = arith.constant 0 : index
    %10 = memref.load %arg5[%c0_9, %c0_10] : memref<1x1xf32, #tpu.memory_space<smem>>
    %11 = vector.broadcast %10 : f32 to vector<1x128xf32>
    %12 = arith.addf %9, %11 : vector<1x128xf32>
    %c0_11 = arith.constant 0 : index
    %c0_12 = arith.constant 0 : index
    %13 = vector.load %arg6[%c0_11, %c0_12] : memref<1x128xf32, #tpu.memory_space<vmem>>, vector<1x128xf32>
    tpu.vector_store %arg6[%c0_11, %c0_12], %12 {strides = array<i32>} : memref<1x128xf32, #tpu.memory_space<vmem>>, vector<1x128xf32>,
    return
  }
  func.func @transform_0(%arg0: i32) -> (i32, i32) {
    %c0_i32 = arith.constant 0 : i32
    %c0_i32_0 = arith.constant 0 : i32
    return %c0_i32, %arg0 : i32, i32
  }
  func.func @transform_1(%arg0: i32) -> (i32, i32) {
    %c0_i32 = arith.constant 0 : i32
    %c0_i32_0 = arith.constant 0 : i32
    %c0_i32_1 = arith.constant 0 : i32
    return %c0_i32, %c0_i32_0 : i32, i32
  }
  func.func @transform_2(%arg0: i32) -> (i32, i32) {
    %c0_i32 = arith.constant 0 : i32
    %c0_i32_0 = arith.constant 0 : i32
    %c0_i32_1 = arith.constant 0 : i32
    return %c0_i32, %c0_i32_0 : i32, i32
  }
  func.func @transform_3(%arg0: i32) -> (i32, i32) {
    %c0_i32 = arith.constant 0 : i32
    %c0_i32_0 = arith.constant 0 : i32
    %c0_i32_1 = arith.constant 0 : i32
    return %c0_i32, %c0_i32_0 : i32, i32
  }
  func.func @transform_4(%arg0: i32) -> (i32, i32) {
    %c0_i32 = arith.constant 0 : i32
    %c0_i32_0 = arith.constant 0 : i32
    %c0_i32_1 = arith.constant 0 : i32
    return %c0_i32, %c0_i32_0 : i32, i32
  }
  func.func @transform_5(%arg0: i32) -> (i32, i32) {
    %c0_i32 = arith.constant 0 : i32
    %c0_i32_0 = arith.constant 0 : i32
    return %c0_i32, %arg0 : i32, i32
  }
}

</mosaic_0001>

<llo_original>
// kernel: tpu_custom_call.1
$region0: #{tpu_custom_call.1}
  #allocation0 [shape = 'u32[]', space=smem, size = 0x4, offset = 0x4, fixed_abs, tag = 'smem constant byte address 0x4 - core index']
  #allocation1 [shape = 'u32[144,128]{1,0:T(1,128)}', space=vmem, size = 0x12000, scoped, tag = 'internal scratch']
  #allocation2 [shape = 'f32[1,1]{1,0:T(1,128)S(6)}', space=smem, size = 0x200, scoped, tag = 'scoped memory for tpu_custom_call.1']
  %s0 = inlined_call_operand.vmem [shape: bf16[8,128], index: 0, kind: input, shape index: {}]
  %s1 = inlined_call_operand.vmem [shape: bf16[32,8], index: 1, kind: input, shape index: {}]
  %s2 = inlined_call_operand.vmem [shape: f32[32,1], index: 2, kind: input, shape index: {}]
  %s3 = inlined_call_operand.vmem [shape: f32[1,32], index: 3, kind: input, shape index: {}]
  %s4 = inlined_call_operand.<no memory space> [shape: f32[1,1], index: 4, kind: input, shape index: {}]
  %s5 = inlined_call_operand.hbm [shape: f32[1,128], index: 5, kind: output, shape index: {}]
  %s6 = sld [smem:[#allocation0]]
  $region30: #{tpu_custom_call.1} parent=0
    _
  %s8 = ssub.s32 1, %s6
  %s9 = scalar_select 0, %s8, %s6
  %10 = sst [smem:[#allocation2]] %s4
  $region1: #{tpu_custom_call.1} parent=0
    #allocation3 [shape = 'u8[512]{0}', space=vmem, size = 0x400, scoped, tag = 'output window, operand 0, single buffered']
    #allocation4 [shape = 's32[1]{0}', space=sflag, size = 0x4, scoped, tag = 'scoped memory for tpu_custom_call.1']
    %11 = vsyncpa [#allocation4], 0
    // Predicated region
    $region2: #{tpu_custom_call.1} parent=1 // pred_check
      _
    $region3: #{tpu_custom_call.1} parent=1 // pred_check_branch
      %13 = sbr.rel (0) target = $region5
    $region4: #{tpu_custom_call.1} parent=1 // pred_region
      _
    $region5: #{tpu_custom_call.1} parent=1 // pred_fallthru
      _
    // Predicated region
    $region6: #{tpu_custom_call.1} parent=1 // pred_check
      _
    $region7: #{tpu_custom_call.1} parent=1 // pred_check_branch
      %15 = sbr.rel (0) target = $region9
    $region8: #{tpu_custom_call.1} parent=1 // pred_region
      _
    $region9: #{tpu_custom_call.1} parent=1 // pred_fallthru
      _
    // Predicated region
    $region10: #{tpu_custom_call.1} parent=1 // pred_check
      _
    $region11: #{tpu_custom_call.1} parent=1 // pred_check_branch
      %17 = sbr.rel (0) target = $region13
    $region12: #{tpu_custom_call.1} parent=1 // pred_region
      _
    $region13: #{tpu_custom_call.1} parent=1 // pred_fallthru
      _
    // Predicated region
    $region14: #{tpu_custom_call.1} parent=1 // pred_check
      _
    $region15: #{tpu_custom_call.1} parent=1 // pred_check_branch
      %19 = sbr.rel (0) target = $region17
    $region16: #{tpu_custom_call.1} parent=1 // pred_region
      _
    $region17: #{tpu_custom_call.1} parent=1 // pred_fallthru
      _
    // Predicated region
    $region18: #{tpu_custom_call.1} parent=1 // pred_check
      _
    $region19: #{tpu_custom_call.1} parent=1 // pred_check_branch
      %21 = sbr.rel (0) target = $region21
    $region20: #{tpu_custom_call.1} parent=1 // pred_region
      _
    $region21: #{tpu_custom_call.1} parent=1 // pred_fallthru
      _
    %v23 = vld [vmem:[%s1] sm:$0xf]
    %v24 = vld [vmem:[%s1 + $0x4] sm:$0xf]
    %v25 = vld [vmem:[%s1 + $0x8] sm:$0xf]
    %v26 = vld [vmem:[%s1 + $0xc] sm:$0xf]
    %v27 = vld [vmem:[%s0] sm:$0xf]
    %v28 = vld [vmem:[%s2] sm:$0xff]
    %v29 = vld [vmem:[%s2 + $0x8] sm:$0xff]
    %v30 = vld [vmem:[%s2 + $0x10] sm:$0xff]
    %v31 = vld [vmem:[%s2 + $0x18] sm:$0xff]
    %33 = vset.pattern.permute.xlu0 0
    %34 = vperm.xlu0 %33, %v28
    %v35 = vpop.permute.xlu0 %34
    %38 = vset.pattern.permute.xlu0 0
    %39 = vperm.xlu0 %38, %v29
    %v40 = vpop.permute.xlu0 %39
    %43 = vset.pattern.permute.xlu0 0
    %44 = vperm.xlu0 %43, %v30
    %v45 = vpop.permute.xlu0 %44
    %48 = vset.pattern.permute.xlu0 0
    %49 = vperm.xlu0 %48, %v31
    %v50 = vpop.permute.xlu0 %49
    %v56 = vunpack.c.l.b16 %v23
    %v57 = vunpack.c.l.b16 %v24
    %v58 = vunpack.c.l.b16 %v25
    %v59 = vunpack.c.l.b16 %v26
    %v60 = vpack.c.b16 %v57, %v56
    %v61 = vpack.c.b16 %v59, %v58
    %vm62 = vcmask 64512
    %v64 = vsel %vm62, %v60, 0
    %v67 = vsel %vm62, %v61, 0
    %vm69 = vcmask 1043456
    %v71 = vsel %vm69, %v27, 0
    %73 = vmatprep.subr.bf16.mxu0 0
    %74 = vmatpush1.bf16.msra.mxu0 0
    %75 = vmatprep.subr.bf16.mxu0 0
    %76 = vmatpush1.bf16.msra.mxu0 0
    %77 = vmatprep.subr.bf16.mxu0 0
    %78 = vmatpush1.bf16.msra.mxu0 0
    %79 = vmatprep.subr.bf16.mxu0 0
    %80 = vmatpush1.bf16.msra.mxu0 0
    %81 = vmatprep.subr.bf16.mxu0 0
    %82 = vmatpush1.bf16.msra.mxu0 0
    %83 = vmatprep.subr.bf16.mxu0 0
    %84 = vmatpush1.bf16.msra.mxu0 0
    %85 = vmatprep.subr.bf16.mxu0 0
    %86 = vmatpush1.bf16.msra.mxu0 0
    %87 = vmatprep.subr.bf16.mxu0 0
    %88 = vmatpush1.bf16.msra.mxu0 %v71
    %89 = vmatprep.subr.bf16.mxu0 0
    %90 = vmatpush2.bf16.msra.mxu0 0
    %91 = vmatprep.subr.bf16.mxu0 0
    %92 = vmatpush2.bf16.msra.mxu0 0
    %93 = vmatprep.subr.bf16.mxu0 0
    %94 = vmatpush2.bf16.msra.mxu0 0
    %95 = vmatprep.subr.bf16.mxu0 0
    %96 = vmatpush2.bf16.msra.mxu0 0
    %97 = vmatprep.subr.bf16.mxu0 0
    %98 = vmatpush2.bf16.msra.mxu0 0
    %99 = vmatprep.subr.bf16.mxu0 0
    %100 = vmatpush2.bf16.msra.mxu0 0
    %101 = vmatprep.subr.bf16.mxu0 0
    %102 = vmatpush2.bf16.msra.mxu0 0
    %103 = vmatprep.subr.bf16.mxu0 0
    %104 = vmatpush2.bf16.msra.mxu0 0
    %105 = vmatprep.mubr.bf16.mxu0 0
    %106 = vmatmul.mubr.bf16.gmra.mxu0 %v64
    %v107 = vpop.f32.mrf.mxu0
    %v108 = vadd.f32 %v35, %v107
    %v109 = vpop.f32.mrf.mxu0
    %v110 = vpop.f32.mrf.mxu0
    %v111 = vadd.f32 %v40, %v110
    %v112 = vpop.f32.mrf.mxu0
    %113 = vmatprep.mubr.bf16.mxu0 0
    %114 = vmatmul.mubr.bf16.gmra.mxu0 %v67
    %v115 = vpop.f32.mrf.mxu0
    %v116 = vadd.f32 %v45, %v115
    %v117 = vpop.f32.mrf.mxu0
    %v118 = vpop.f32.mrf.mxu0
    %v119 = vadd.f32 %v50, %v118
    %v120 = vpop.f32.mrf.mxu0
    %121 = vdwg.mxu0
    %v122 = vmax.f32 %v108, 0.0
    %v123 = vmax.f32 %v111, 0.0
    %v124 = vmax.f32 %v116, 0.0
    %v125 = vmax.f32 %v119, 0.0
    %v126 = vld [vmem:[%s3] sm:$0x1]
    %s127 = sld [smem:[#allocation2]]
    %v128 = vstv %s127
    %vm129 = vcmask 261120
    %v131 = vsel %vm129, %v126, 0
    %133 = vmatprep.subr.mxu0 0.0
    %134 = vmatpush1.msra.mxu0 0.0
    %135 = vmatprep.subr.mxu0 0.0
    %136 = vmatpush1.msra.mxu0 0.0
    %137 = vmatprep.subr.mxu0 0.0
    %138 = vmatpush1.msra.mxu0 0.0
    %139 = vmatprep.subr.mxu0 0.0
    %140 = vmatpush1.msra.mxu0 0.0
    %141 = vmatprep.subr.mxu0 0.0
    %142 = vmatpush1.msra.mxu0 0.0
    %143 = vmatprep.subr.mxu0 0.0
    %144 = vmatpush1.msra.mxu0 0.0
    %145 = vmatprep.subr.mxu0 0.0
    %146 = vmatpush1.msra.mxu0 0.0
    %147 = vmatprep.subr.mxu0 0.0
    %148 = vmatpush1.msra.mxu0 0.0
    %149 = vmatprep.subr.mxu0 0.0
    %150 = vmatpush1.msra.mxu0 0.0
    %151 = vmatprep.subr.mxu0 0.0
    %152 = vmatpush1.msra.mxu0 0.0
    %153 = vmatprep.subr.mxu0 0.0
    %154 = vmatpush1.msra.mxu0 0.0
    %155 = vmatprep.subr.mxu0 0.0
    %156 = vmatpush1.msra.mxu0 0.0
    %157 = vmatprep.subr.mxu0 0.0
    %158 = vmatpush1.msra.mxu0 %v125
    %159 = vmatprep.subr.mxu0 0.0
    %160 = vmatpush1.msra.mxu0 %v124
    %161 = vmatprep.subr.mxu0 0.0
    %162 = vmatpush1.msra.mxu0 %v123
    %163 = vmatprep.subr.mxu0 0.0
    %164 = vmatpush1.msra.mxu0 %v122
    %165 = vmatprep.subr.mxu0 0.0
    %166 = vmatpush2.msra.mxu0 0.0
    %167 = vmatprep.subr.mxu0 0.0
    %168 = vmatpush2.msra.mxu0 0.0
    %169 = vmatprep.subr.mxu0 0.0
    %170 = vmatpush2.msra.mxu0 0.0
    %171 = vmatprep.subr.mxu0 0.0
    %172 = vmatpush2.msra.mxu0 0.0
    %173 = vmatprep.subr.mxu0 0.0
    %174 = vmatpush2.msra.mxu0 0.0
    %175 = vmatprep.subr.mxu0 0.0
    %176 = vmatpush2.msra.mxu0 0.0
    %177 = vmatprep.subr.mxu0 0.0
    %178 = vmatpush2.msra.mxu0 0.0
    %179 = vmatprep.subr.mxu0 0.0
    %180 = vmatpush2.msra.mxu0 0.0
    %181 = vmatprep.subr.mxu0 0.0
    %182 = vmatpush2.msra.mxu0 0.0
    %183 = vmatprep.subr.mxu0 0.0
    %184 = vmatpush2.msra.mxu0 0.0
    %185 = vmatprep.subr.mxu0 0.0
    %186 = vmatpush2.msra.mxu0 0.0
    %187 = vmatprep.subr.mxu0 0.0
    %188 = vmatpush2.msra.mxu0 0.0
    %189 = vmatprep.subr.mxu0 0.0
    %190 = vmatpush2.msra.mxu0 0.0
    %191 = vmatprep.subr.mxu0 0.0
    %192 = vmatpush2.msra.mxu0 0.0
    %193 = vmatprep.subr.mxu0 0.0
    %194 = vmatpush2.msra.mxu0 0.0
    %195 = vmatprep.subr.mxu0 0.0
    %196 = vmatpush2.msra.mxu0 0.0
    %197 = vmatprep.mubr.f32.mxu0 0.0
    %198 = vmatmul.mubr.f32.gmra.mxu0 %v131
    %v199 = vpop.f32.mrf.mxu0
    %v200 = vadd.f32 %v128, %v199
    %v201 = vpop.f32.mrf.mxu0
    %202 = vdwg.mxu0
    %203 = vst [vmem:[#allocation3] sm:$0x1] %v200
    // Predicated region
    $region22: #{tpu_custom_call.1} parent=1 // pred_check
      _
    $region23: #{tpu_custom_call.1} parent=1 // pred_check_branch
      %205 = sbr.rel (0) target = $region25
    $region24: #{tpu_custom_call.1} parent=1 // pred_region
      %s207 = ssub.s32 16, 16
      %208 = vsyncadd [#allocation4], %s207
      %s210 = sshll.u32 [#allocation3], 4
      %s211 = int_to_ptr.vmem [resolvable:$true] %s210
      %213 = dma.vmem_to_hbm [thread:$0]  %s211, 16, %s5, [#allocation4]
    $region25: #{tpu_custom_call.1} parent=1 // pred_fallthru
      _
    // Predicated region
    $region26: #{tpu_custom_call.1} parent=1 // pred_check
      _
    $region27: #{tpu_custom_call.1} parent=1 // pred_check_branch
      %215 = sbr.rel (0) target = $region29
    $region28: #{tpu_custom_call.1} parent=1 // pred_region
      %216 = dma.done [#allocation4], 16
    $region29: #{tpu_custom_call.1} parent=1 // pred_fallthru
      _
    %217 = vsyncpa [#allocation4], 1

</llo_original>
